<compile_context>
chip_gen: v7x
topology: tpu7x:2x2x1
jax: 0.10.0
libtpu: 0.0.40
codegen_flags: <defaults>
</compile_context>

<pallas_src>
import math

import jax
import jax.numpy as jnp
from jax.experimental import pallas as pl
from jax.experimental.pallas import tpu as pltpu

# ---- problem / model sizes (small, consistent with the toy net) -------------
B = 16          # batch
D = 4           # data dim (x.shape[1])
H = 32          # hidden dim
T_DIM = 16      # sinusoidal time-embedding dim
HALF = T_DIM // 2

# SDE / opt constants
BETA_MIN = 0.1
BETA_MAX = 20.0
OPT_T = 1.0
OPT_INTERVAL = 100
USE_T_IDX = False
SCALE_BY_G = True

# ---- packed-weight slab layout (f32, shape (104, 128)) -----------------------
K1 = T_DIM + 1 + D           # 21 : fused input rows = [emb(16) | t(1, zero col) | x(4)]
R_W1T = 0                    # rows  0..63, lanes 0..20 : block-diag W1^T (64, 21)
R_W23T = 2 * H               # rows 64..95, lanes 0..63 : fused [wt2@wo1 | wo1]^T (32, 64)
R_WO2T = R_W23T + H          # rows 96..99, lanes 0..31 : wo2^T (4, 32)
SLAB_ROWS = 104              # multiple of 8
SLAB_LANES = 128
# bias / freq columns (stored as columns so they broadcast along lanes = batch)
L_B1 = 64                    # rows 0..63 : [bt1 ; bx1]
L_B23 = 65                   # rows 0..31 : bt2@wo1 + bo1
L_BO2 = 66                   # rows 0..3  : bo2
L_FREQ = 67                  # rows 0..15 : [freqs ; freqs]
L_PHASE = 68                 # rows 0..15 : [0 ; pi/2]   (cos(a) = sin(a + pi/2))

TB_MAX = 8192                # max batch lanes per grid step
TC_SPLIT = 512               # >= this: force >=2 parallel steps (v7x has 2 TensorCores)


def _silu(v):
    return v * jax.nn.sigmoid(v)


def _round_up(n, m):
    return ((n + m - 1) // m) * m


# ------------------------------ kernel ---------------------------------------
def policy_kernel(tx_ref, w_ref, out_ref):
    tx = tx_ref[...]                               # (1+D, TB)  rows: [t | x0..x3]
    t = tx[0:1, :]                                 # (1, TB)   physical time

    # time the net sees (index-rescaled if use_t_idx); g(t) uses physical t below.
    t_net = t * (OPT_INTERVAL / OPT_T) if USE_T_IDX else t

    # --- sinusoidal embedding in one transcendental: sin(t*f16 + phase16) ----
    freqs = w_ref[0:T_DIM, L_FREQ:L_FREQ + 1]      # (16, 1) = [f ; f]
    phase = w_ref[0:T_DIM, L_PHASE:L_PHASE + 1]    # (16, 1) = [0 ; pi/2]
    emb = jnp.sin(t_net * freqs + phase)           # (16, TB) = [sin ; cos]

    # --- fused first layer: W1^T @ [emb ; t ; x]  (block-diag, t col is zero) -
    in1 = jnp.concatenate([emb, tx], axis=0)       # (21, TB)
    W1T = w_ref[R_W1T:R_W1T + 2 * H, 0:K1]         # (64, 21)
    b1 = w_ref[0:2 * H, L_B1:L_B1 + 1]             # (64, 1) = [bt1 ; bx1]
    s = _silu(jnp.dot(W1T, in1, preferred_element_type=jnp.float32) + b1)  # (64, TB)
    # rows 0..31 = SiLU(time-branch pre-act), rows 32..63 = SiLU(state-branch pre-act)

    # --- fused layers 2+3: wo1^T @ (x_h + wt2^T @ t_h + bt2^T) + bo1^T -------
    W23T = w_ref[R_W23T:R_W23T + H, 0:2 * H]       # (32, 64) = [ (wt2@wo1)^T | wo1^T ]
    b23 = w_ref[0:H, L_B23:L_B23 + 1]              # (32, 1)
    h2 = _silu(jnp.dot(W23T, s, preferred_element_type=jnp.float32) + b23)  # (32, TB)

    # --- output head -----------------------------------------------------------
    WO2T = w_ref[R_WO2T:R_WO2T + D, 0:H]           # (4, 32)
    bo2 = w_ref[0:D, L_BO2:L_BO2 + 1]              # (4, 1)
    out = jnp.dot(WO2T, h2, preferred_element_type=jnp.float32) + bo2       # (4, TB)

    # --- scale by g(t) (dyn.g, broadcast over feature dims) — physical t -------
    if SCALE_BY_G:
        g = jnp.sqrt(BETA_MIN + t * (BETA_MAX - BETA_MIN))                  # (1, TB)
        out = out * g

    out_ref[...] = out.astype(out_ref.dtype)


# ------------------------------ wrapper ---------------------------------------
@jax.jit
def schrodinger_bridge_policy(x, t, slab):
    """x: [B, D] f32; t: scalar, [B] or [B,1] f32; slab: packed weights (104, 128) f32."""
    b_in = x.shape[0]
    # --- reproduce the PyTorch t handling -------------------------------------
    t = jnp.squeeze(jnp.asarray(t, jnp.float32))
    if t.ndim == 0:
        t = jnp.broadcast_to(t, (b_in,))
    assert t.ndim == 1 and t.shape[0] == b_in

    # batch on the lane axis: activations travel as (1+D, B_pad), B_pad % 128 == 0
    tx = jnp.concatenate([t.reshape(1, b_in), x.astype(jnp.float32).T], axis=0)

    b_pad = _round_up(b_in, 128)
    tb = min(b_pad, TB_MAX)
    if b_pad >= TC_SPLIT and b_pad // tb < 2:
        # >=2 parallel grid steps so v7x can shard the batch across its 2 TCs
        tb = _round_up((b_pad + 1) // 2, 128)
    b_pad = _round_up(b_pad, tb)
    if b_pad != b_in:
        tx = jnp.pad(tx, ((0, 0), (0, b_pad - b_in)))
    grid = (b_pad // tb,)

    out = pl.pallas_call(
        policy_kernel,
        out_shape=jax.ShapeDtypeStruct((D, b_pad), jnp.float32),
        grid=grid,
        in_specs=[
            pl.BlockSpec((1 + D, tb), lambda i: (0, i)),                  # [t | x]^T
            pl.BlockSpec((SLAB_ROWS, SLAB_LANES), lambda i: (0, 0)),      # weight slab (resident)
        ],
        out_specs=pl.BlockSpec((D, tb), lambda i: (0, i)),
        compiler_params=pltpu.CompilerParams(
            dimension_semantics=("parallel",)),
    )(tx, slab)
    return out[:, :b_in].T


# ------------------------------ params ----------------------------------------
def init_params(key):
    ks = jax.random.split(key, 5)
    s = 0.1
    # sinusoidal embedding frequencies (transformer-style); must match the
    # convention of the PyTorch net being mirrored when loading real checkpoints.
    freqs = jnp.exp(-math.log(10000.0) * jnp.arange(HALF, dtype=jnp.float32) / HALF)
    return dict(
        freqs=freqs.reshape(1, HALF),
        wt1=s * jax.random.normal(ks[0], (T_DIM, H), jnp.float32),
        bt1=jnp.zeros((1, H), jnp.float32),
        wt2=s * jax.random.normal(ks[1], (H, H), jnp.float32),
        bt2=jnp.zeros((1, H), jnp.float32),
        wx1=s * jax.random.normal(ks[2], (D, H), jnp.float32),
        bx1=jnp.zeros((1, H), jnp.float32),
        wo1=s * jax.random.normal(ks[3], (H, H), jnp.float32),
        bo1=jnp.zeros((1, H), jnp.float32),
        wo2=s * jax.random.normal(ks[4], (H, D), jnp.float32),
        bo2=jnp.zeros((1, D), jnp.float32),
    )


def pack_params(p):
    """Pack everything into one f32 slab (done once, off the hot path).

    Includes the offline fusion W23 = [wt2@wo1 ; wo1] and b23 = bt2@wo1 + bo1, the
    transposed block-diagonal first layer, and the duplicated-freq + phase columns.
    """
    slab = jnp.zeros((SLAB_ROWS, SLAB_LANES), jnp.float32)
    # block-diagonal W1^T: rows = output channels (64), cols = [emb(16) | t(1)=0 | x(4)]
    slab = slab.at[0:H, 0:T_DIM].set(p["wt1"].T)
    slab = slab.at[H:2 * H, T_DIM + 1:T_DIM + 1 + D].set(p["wx1"].T)
    # fused layers 2+3
    w23 = jnp.concatenate([p["wt2"] @ p["wo1"], p["wo1"]], axis=0)        # (64, 32)
    slab = slab.at[R_W23T:R_W23T + H, 0:2 * H].set(w23.T)
    # output head
    slab = slab.at[R_WO2T:R_WO2T + D, 0:H].set(p["wo2"].T)
    # bias columns
    slab = slab.at[0:H, L_B1].set(p["bt1"][0])
    slab = slab.at[H:2 * H, L_B1].set(p["bx1"][0])
    b23 = (p["bt2"] @ p["wo1"] + p["bo1"])[0]                             # (32,)
    slab = slab.at[0:H, L_B23].set(b23)
    slab = slab.at[0:D, L_BO2].set(p["bo2"][0])
    # duplicated freqs + phase columns: sin(a), sin(a + pi/2) = cos(a)
    f = p["freqs"][0]
    slab = slab.at[0:HALF, L_FREQ].set(f)
    slab = slab.at[HALF:T_DIM, L_FREQ].set(f)
    slab = slab.at[HALF:T_DIM, L_PHASE].set(jnp.full((HALF,), math.pi / 2, jnp.float32))
    return slab


# ------------------------------ reference -------------------------------------
def _reference(x, t, p):
    """Pure-JAX reference mirroring the PyTorch module (unfused math)."""
    t = jnp.squeeze(t)
    if t.ndim == 0:
        t = jnp.broadcast_to(t, (x.shape[0],))
    t_phys = t.reshape(-1, 1)
    t_net = t_phys / OPT_T * OPT_INTERVAL if USE_T_IDX else t_phys
    args = t_net * p["freqs"]
    emb = jnp.concatenate([jnp.sin(args), jnp.cos(args)], axis=-1)

    def silu(v):
        return v * (1.0 / (1.0 + jnp.exp(-v)))

    th = silu(emb @ p["wt1"] + p["bt1"]) @ p["wt2"] + p["bt2"]
    xh = silu(x @ p["wx1"] + p["bx1"])
    h = silu((xh + th) @ p["wo1"] + p["bo1"])
    out = h @ p["wo2"] + p["bo2"]
    if SCALE_BY_G:
        out = out * jnp.sqrt(BETA_MIN + t_phys * (BETA_MAX - BETA_MIN))
    return out


if __name__ == "__main__":
    key = jax.random.PRNGKey(0)
    k_x, k_t, k_p = jax.random.split(key, 3)

    params = init_params(k_p)
    slab = pack_params(params)
    x = jax.random.normal(k_x, (B, D), jnp.float32)
    t = jax.random.uniform(k_t, (B,), jnp.float32, 0.0, OPT_T)

    out = jax.block_until_ready(schrodinger_bridge_policy(x, t, slab))

    ref = _reference(x, t, params)
    assert out.shape == (B, D)
    assert jnp.allclose(out, ref, atol=2e-5, rtol=2e-5), "mismatch vs reference"

    print("KERNEL_OK")
</pallas_src>

<mosaic_0001>
module attributes {stable_mosaic.version = 11 : i64} {
  func.func @policy_kernel(%arg0: i32, %arg1: memref<5x128xf32, #tpu.memory_space<vmem>>, %arg2: memref<104x128xf32, #tpu.memory_space<vmem>>, %arg3: memref<4x128xf32, #tpu.memory_space<vmem>>) attributes {dimension_semantics = [#tpu.dimension_semantics<parallel>], iteration_bounds = array<i64: 1>, scalar_prefetch = 0 : i64, scratch_operands = 0 : i64, tpu.core_type = #tpu.core_type<tc>, window_params = [{transform_indices = @transform_0, window_bounds = array<i64: 5, 128>}, {pipeline_mode = #tpu.pipeline_mode<synchronous>, transform_indices = @transform_1, window_bounds = array<i64: 104, 128>}, {transform_indices = @transform_2, window_bounds = array<i64: 4, 128>}]} {
    %c0 = arith.constant 0 : index
    %c0_0 = arith.constant 0 : index
    %0 = vector.load %arg1[%c0, %c0_0] : memref<5x128xf32, #tpu.memory_space<vmem>>, vector<5x128xf32>
    %1 = vector.extract_strided_slice %0 {offsets = [0, 0], sizes = [1, 128], strides = [1, 1]} : vector<5x128xf32> to vector<1x128xf32>
    %c0_1 = arith.constant 0 : index
    %c67 = arith.constant 67 : index
    %2 = vector.load %arg2[%c0_1, %c67] : memref<104x128xf32, #tpu.memory_space<vmem>>, vector<16x1xf32>
    %c0_2 = arith.constant 0 : index
    %c68 = arith.constant 68 : index
    %3 = vector.load %arg2[%c0_2, %c68] : memref<104x128xf32, #tpu.memory_space<vmem>>, vector<16x1xf32>
    %4 = vector.broadcast %1 : vector<1x128xf32> to vector<16x128xf32>
    %5 = vector.broadcast %2 : vector<16x1xf32> to vector<16x128xf32>
    %6 = arith.mulf %4, %5 : vector<16x128xf32>
    %7 = vector.broadcast %3 : vector<16x1xf32> to vector<16x128xf32>
    %8 = arith.addf %6, %7 : vector<16x128xf32>
    %9 = math.sin %8 : vector<16x128xf32>
    %10 = tpu.concatenate %9, %0 in 0 : vector<16x128xf32>, vector<5x128xf32> -> vector<21x128xf32>
    %c0_3 = arith.constant 0 : index
    %c0_4 = arith.constant 0 : index
    %11 = vector.load %arg2[%c0_3, %c0_4] : memref<104x128xf32, #tpu.memory_space<vmem>>, vector<64x21xf32>
    %c0_5 = arith.constant 0 : index
    %c64 = arith.constant 64 : index
    %12 = vector.load %arg2[%c0_5, %c64] : memref<104x128xf32, #tpu.memory_space<vmem>>, vector<64x1xf32>
    %cst = arith.constant dense<0.000000e+00> : vector<64x128xf32>
    %13 = tpu.matmul %11, %10, %cst {dimension_numbers = #tpu.dot_dimension_numbers<[1], [0], [0], [1], [0, 0, 1, 1], [], []>} : vector<64x21xf32>, vector<21x128xf32>, vector<64x128xf32> -> vector<64x128xf32>
    %14 = vector.broadcast %12 : vector<64x1xf32> to vector<64x128xf32>
    %15 = arith.addf %13, %14 : vector<64x128xf32>
    %16 = arith.negf %15 : vector<64x128xf32>
    %17 = math.exp %16 : vector<64x128xf32>
    %cst_6 = arith.constant 1.000000e+00 : f32
    %18 = vector.broadcast %cst_6 : f32 to vector<64x128xf32>
    %19 = arith.addf %18, %17 : vector<64x128xf32>
    %20 = arith.divf %18, %19 : vector<64x128xf32>
    %21 = arith.mulf %15, %20 : vector<64x128xf32>
    %c64_7 = arith.constant 64 : index
    %c0_8 = arith.constant 0 : index
    %22 = vector.load %arg2[%c64_7, %c0_8] : memref<104x128xf32, #tpu.memory_space<vmem>>, vector<32x64xf32>
    %c0_9 = arith.constant 0 : index
    %c65 = arith.constant 65 : index
    %23 = vector.load %arg2[%c0_9, %c65] : memref<104x128xf32, #tpu.memory_space<vmem>>, vector<32x1xf32>
    %cst_10 = arith.constant dense<0.000000e+00> : vector<32x128xf32>
    %24 = tpu.matmul %22, %21, %cst_10 {dimension_numbers = #tpu.dot_dimension_numbers<[1], [0], [0], [1], [0, 0, 1, 1], [], []>} : vector<32x64xf32>, vector<64x128xf32>, vector<32x128xf32> -> vector<32x128xf32>
    %25 = vector.broadcast %23 : vector<32x1xf32> to vector<32x128xf32>
    %26 = arith.addf %24, %25 : vector<32x128xf32>
    %27 = arith.negf %26 : vector<32x128xf32>
    %28 = math.exp %27 : vector<32x128xf32>
    %cst_11 = arith.constant 1.000000e+00 : f32
    %29 = vector.broadcast %cst_11 : f32 to vector<32x128xf32>
    %30 = arith.addf %29, %28 : vector<32x128xf32>
    %31 = arith.divf %29, %30 : vector<32x128xf32>
    %32 = arith.mulf %26, %31 : vector<32x128xf32>
    %c96 = arith.constant 96 : index
    %c0_12 = arith.constant 0 : index
    %33 = vector.load %arg2[%c96, %c0_12] : memref<104x128xf32, #tpu.memory_space<vmem>>, vector<4x32xf32>
    %c0_13 = arith.constant 0 : index
    %c66 = arith.constant 66 : index
    %34 = vector.load %arg2[%c0_13, %c66] : memref<104x128xf32, #tpu.memory_space<vmem>>, vector<4x1xf32>
    %cst_14 = arith.constant dense<0.000000e+00> : vector<4x128xf32>
    %35 = tpu.matmul %33, %32, %cst_14 {dimension_numbers = #tpu.dot_dimension_numbers<[1], [0], [0], [1], [0, 0, 1, 1], [], []>} : vector<4x32xf32>, vector<32x128xf32>, vector<4x128xf32> -> vector<4x128xf32>
    %36 = vector.broadcast %34 : vector<4x1xf32> to vector<4x128xf32>
    %37 = arith.addf %35, %36 : vector<4x128xf32>
    %cst_15 = arith.constant 1.990000e+01 : f32
    %38 = vector.broadcast %cst_15 : f32 to vector<1x128xf32>
    %39 = arith.mulf %1, %38 : vector<1x128xf32>
    %cst_16 = arith.constant 1.000000e-01 : f32
    %40 = vector.broadcast %cst_16 : f32 to vector<1x128xf32>
    %41 = arith.addf %40, %39 : vector<1x128xf32>
    %42 = math.sqrt %41 : vector<1x128xf32>
    %43 = vector.broadcast %42 : vector<1x128xf32> to vector<4x128xf32>
    %44 = arith.mulf %37, %43 : vector<4x128xf32>
    %c0_17 = arith.constant 0 : index
    %c0_18 = arith.constant 0 : index
    %45 = vector.load %arg3[%c0_17, %c0_18] : memref<4x128xf32, #tpu.memory_space<vmem>>, vector<4x128xf32>
    tpu.vector_store %arg3[%c0_17, %c0_18], %44 {strides = array<i32>} : memref<4x128xf32, #tpu.memory_space<vmem>>, vector<4x128xf32>,
    return
  }
  func.func @transform_0(%arg0: i32) -> (i32, i32) {
    %c0_i32 = arith.constant 0 : i32
    %c0_i32_0 = arith.constant 0 : i32
    return %c0_i32, %arg0 : i32, i32
  }
  func.func @transform_1(%arg0: i32) -> (i32, i32) {
    %c0_i32 = arith.constant 0 : i32
    %c0_i32_0 = arith.constant 0 : i32
    %c0_i32_1 = arith.constant 0 : i32
    return %c0_i32, %c0_i32_0 : i32, i32
  }
  func.func @transform_2(%arg0: i32) -> (i32, i32) {
    %c0_i32 = arith.constant 0 : i32
    %c0_i32_0 = arith.constant 0 : i32
    return %c0_i32, %arg0 : i32, i32
  }
}

</mosaic_0001>

<llo_original>
// kernel: schrodinger_bridge_policy.1
$region0: #{schrodinger_bridge_policy.1}
  #allocation0 [shape = 'u32[]', space=smem, size = 0x4, offset = 0x4, fixed_abs, tag = 'smem constant byte address 0x4 - core index']
  #allocation1 [shape = 'u32[144,128]{1,0:T(1,128)}', space=vmem, size = 0x12000, scoped, tag = 'internal scratch']
  %s0 = inlined_call_operand.vmem [shape: f32[5,128], index: 0, kind: input, shape index: {}]
  %s1 = inlined_call_operand.hbm [shape: f32[104,128], index: 1, kind: input, shape index: {}]
  %s2 = inlined_call_operand.vmem [shape: f32[4,128], index: 2, kind: output, shape index: {}]
  %s3 = sld [smem:[#allocation0]]
  $region22: #{schrodinger_bridge_policy.1} parent=0
    _
  %s5 = ssub.s32 1, %s3
  %s6 = scalar_select 0, %s5, %s3
  $region1: #{schrodinger_bridge_policy.1} parent=0
    #allocation2 [shape = 'u8[53248]{0}', space=vmem, size = 0xd000, scoped, tag = 'input window, operand 1, single buffered']
    #allocation3 [shape = 's32[1]{0}', space=sflag, size = 0x4, scoped, tag = 'scoped memory for schrodinger_bridge_policy.1']
    %7 = vsyncpa [#allocation3], 0
    // Predicated region
    $region2: #{schrodinger_bridge_policy.1} parent=1 // pred_check
      _
    $region3: #{schrodinger_bridge_policy.1} parent=1 // pred_check_branch
      %9 = sbr.rel (0) target = $region5
    $region4: #{schrodinger_bridge_policy.1} parent=1 // pred_region
      _
    $region5: #{schrodinger_bridge_policy.1} parent=1 // pred_fallthru
      _
    // Predicated region
    $region6: #{schrodinger_bridge_policy.1} parent=1 // pred_check
      _
    $region7: #{schrodinger_bridge_policy.1} parent=1 // pred_check_branch
      %11 = sbr.rel (0) target = $region9
    $region8: #{schrodinger_bridge_policy.1} parent=1 // pred_region
      %s13 = ssub.s32 1664, 1664
      %14 = vsyncadd [#allocation3], %s13
      %s15 = sshll.u32 [#allocation2], 4
      %s16 = int_to_ptr.vmem [resolvable:$true] %s15
      %21 = dma.hbm_to_vmem [thread:$0]  %s1, 1664, %s16, [#allocation3], 128, 128, 8
    $region9: #{schrodinger_bridge_policy.1} parent=1 // pred_fallthru
      _
    // Predicated region
    $region10: #{schrodinger_bridge_policy.1} parent=1 // pred_check
      _
    $region11: #{schrodinger_bridge_policy.1} parent=1 // pred_check_branch
      %23 = sbr.rel (0) target = $region13
    $region12: #{schrodinger_bridge_policy.1} parent=1 // pred_region
      %24 = dma.done [#allocation3], 1664
    $region13: #{schrodinger_bridge_policy.1} parent=1 // pred_fallthru
      _
    %v25 = vld [vmem:[%s0] sm:$0x1f]
    %v26 = vld [vmem:[#allocation2] sm:$0xff]
    %v27 = vld [vmem:[#allocation2 + $0x8] sm:$0xff]
    %v28 = vlaneseq
    %v29 = vshrl.u32 %v28, 7
    %v30 = vsub.s32 0, %v29
    %v31 = vrot.slane %v25, %v30
    %33 = vset.pattern.permute.xlu0 67
    %34 = vperm.xlu0 %33, %v26
    %v35 = vpop.permute.xlu0 %34
    %38 = vset.pattern.permute.xlu0 67
    %39 = vperm.xlu0 %38, %v27
    %v40 = vpop.permute.xlu0 %39
    %v42 = vmul.f32 %v31, %v35
    %v43 = vmul.f32 %v31, %v40
    %44 = vset.pattern.permute.xlu0 68
    %45 = vperm.xlu0 %44, %v26
    %v46 = vpop.permute.xlu0 %45
    %48 = vset.pattern.permute.xlu0 68
    %49 = vperm.xlu0 %48, %v27
    %v50 = vpop.permute.xlu0 %49
    %v52 = vadd.f32 %v42, %v46
    %v53 = vadd.f32 %v43, %v50
    %v54 = vand.u32 2147483647, %v52
    %vm55 = vcmp.le.f32.partialorder %v54, 0.7853982
    %vm56 = vcmp.lt.s32.totalorder %v52, 0
    %v57 = vand.u32 %v52, 2139095040
    %v58 = vshrl.u32 %v57, 23
    %v59 = vsub.s32 %v58, 127
    %v60 = vand.u32 2147483647, %v52
    %v61 = vand.u32 %v60, 8388607
    %v62 = vor.u32 %v61, 8388608
    %v63 = vsub.s32 0, %v62
    %v64 = vadd.s32 %v59, 1
    %vm65 = vcmp.gt.s32.totalorder %v64, 0
    %v66 = vsel %vm65, %v64, 0
    %v67 = vshrl.u32 %v66, 5
    %v68 = vand.u32 %v66, 31
    %v69 = vsub.s32 32, %v68
    %v70 = vshrl.u32 683565275, %v69
    %v71 = vshll.u32 683565275, %v68
    %v72 = vshrl.u32 2475754826, %v69
    %v73 = vor.u32 %v71, %v72
    %v74 = vshll.u32 2475754826, %v68
    %v75 = vshrl.u32 2131351028, %v69
    %v76 = vor.u32 %v74, %v75
    %v77 = vshll.u32 2131351028, %v68
    %v78 = vshrl.u32 2102212464, %v69
    %v79 = vor.u32 %v77, %v78
    %v80 = vshll.u32 2102212464, %v68
    %v81 = vshrl.u32 920167782, %v69
    %v82 = vor.u32 %v80, %v81
    %v83 = vshll.u32 920167782, %v68
    %v84 = vshrl.u32 1326507024, %v69
    %v85 = vor.u32 %v83, %v84
    %vm86 = vcmp.lt.s32.totalorder %v67, 1
    %vm87 = vcmp.lt.s32.totalorder %v67, 2
    %vm88 = vcmp.lt.s32.totalorder %v67, 3
    %vm89 = vcmp.lt.s32.totalorder %v67, 4
    %v90 = vsel %vm86, %v70, %v73
    %v91 = vsel %vm89, %v79, 2102212464
    %v92 = vsel %vm88, %v76, %v91
    %v93 = vsel %vm87, %v90, %v92
    %v94 = vsel %vm86, %v73, %v76
    %v95 = vsel %vm89, %v82, 920167782
    %v96 = vsel %vm88, %v79, %v95
    %v97 = vsel %vm87, %v94, %v96
    %v98 = vsel %vm86, %v76, %v79
    %v99 = vsel %vm89, %v85, 1326507024
    %v100 = vsel %vm88, %v82, %v99
    %v101 = vsel %vm87, %v98, %v100
    %v102 = vshll.u32 %v62, 8
    %v103 = vmul.u32.u64.compose %v102, %v101
    %v104 = vextract.low.u32 %v103
    %v105 = vextract.high.u32 %v103
    %v106 = vmul.u32.u64.compose %v102, %v97
    %v107 = vextract.low.u32 %v106
    %v108 = vextract.high.u32 %v106
    %v109 = vmul.u32 %v102, %v93
    %v110 = vadd.s32 %v105, %v107
    %vm111 = vc.u32 %v105, %v107
    %v112 = vadd.s32 %v108, 1
    %v113 = vsel %vm111, %v112, %v108
    %v114 = vadd.s32 %v109, %v113
    %v115 = vadd.s32 %v114, 536870912
    %v116 = vshrl.u32 %v115, 30
    %v117 = vshll.u32 %v116, 30
    %v118 = vsub.s32 %v114, %v117
    %vm119 = vcmp.lt.s32.totalorder %v118, 0
    %v120 = vsub.s32 0, %v118
    %v121 = vsel %vm119, %v120, %v118
    %v122 = vclz %v121
    %v123 = vsub.s32 %v122, 2
    %vm124 = vcmp.gt.s32.totalorder 0, %v123
    %v125 = vsel %vm124, 0, %v123
    %v126 = vsub.s32 32, %v125
    %v127 = vshll.u32 %v118, %v125
    %v128 = vshrl.u32 %v110, %v126
    %v129 = vor.u32 %v127, %v128
    %v130 = vsub.s32 4294967266, %v125
    %v131 = vadd.s32 %v130, 127
    %v132 = vshll.u32 %v131, 23
    %v133 = vor.u32 4788187, %v132
    %v134 = vand.u32 2147483647, %v133
    %v136 = vcvt.s32.f32 %v129
    %v137 = vmul.f32 %v136, %v134
    %v138 = vxor.u32 %v137, 2147483648
    %v139 = vsel %vm56, %v138, %v137
    %v140 = vsub.s32 4, %v116
    %v141 = vsel %vm56, %v140, %v116
    %v142 = vsel %vm55, %v52, %v139
    %v143 = vsel %vm55, 0, %v141
    %v144 = vcosq.f32.pop %v142
    %v145 = vsinq.f32.pop %v142
    %vm146 = vweird.f32 %v52
    %v147 = vadd.s32 %v143, 3
    %v148 = vand.u32 %v147, 3
    %vm149 = vcmp.lt.s32.totalorder %v148, 2
    %vm150 = vcmp.eq.s32.totalorder %v148, 0
    %v151 = vxor.u32 %v145, 2147483648
    %v152 = vsel %vm150, %v144, %v151
    %vm153 = vcmp.eq.s32.totalorder %v148, 2
    %v154 = vxor.u32 %v144, 2147483648
    %v155 = vsel %vm153, %v154, %v145
    %v156 = vsel %vm149, %v152, %v155
    %v157 = vsel %vm146, nan, %v156
    %v158 = vand.u32 2147483647, %v53
    %vm159 = vcmp.le.f32.partialorder %v158, 0.7853982
    %vm160 = vcmp.lt.s32.totalorder %v53, 0
    %v161 = vand.u32 %v53, 2139095040
    %v162 = vshrl.u32 %v161, 23
    %v163 = vsub.s32 %v162, 127
    %v164 = vand.u32 2147483647, %v53
    %v165 = vand.u32 %v164, 8388607
    %v166 = vor.u32 %v165, 8388608
    %v167 = vsub.s32 0, %v166
    %v168 = vadd.s32 %v163, 1
    %vm169 = vcmp.gt.s32.totalorder %v168, 0
    %v170 = vsel %vm169, %v168, 0
    %v171 = vshrl.u32 %v170, 5
    %v172 = vand.u32 %v170, 31
    %v173 = vsub.s32 32, %v172
    %v174 = vshrl.u32 683565275, %v173
    %v175 = vshll.u32 683565275, %v172
    %v176 = vshrl.u32 2475754826, %v173
    %v177 = vor.u32 %v175, %v176
    %v178 = vshll.u32 2475754826, %v172
    %v179 = vshrl.u32 2131351028, %v173
    %v180 = vor.u32 %v178, %v179
    %v181 = vshll.u32 2131351028, %v172
    %v182 = vshrl.u32 2102212464, %v173
    %v183 = vor.u32 %v181, %v182
    %v184 = vshll.u32 2102212464, %v172
    %v185 = vshrl.u32 920167782, %v173
    %v186 = vor.u32 %v184, %v185
    %v187 = vshll.u32 920167782, %v172
    %v188 = vshrl.u32 1326507024, %v173
    %v189 = vor.u32 %v187, %v188
    %vm190 = vcmp.lt.s32.totalorder %v171, 1
    %vm191 = vcmp.lt.s32.totalorder %v171, 2
    %vm192 = vcmp.lt.s32.totalorder %v171, 3
    %vm193 = vcmp.lt.s32.totalorder %v171, 4
    %v194 = vsel %vm190, %v174, %v177
    %v195 = vsel %vm193, %v183, 2102212464
    %v196 = vsel %vm192, %v180, %v195
    %v197 = vsel %vm191, %v194, %v196
    %v198 = vsel %vm190, %v177, %v180
    %v199 = vsel %vm193, %v186, 920167782
    %v200 = vsel %vm192, %v183, %v199
    %v201 = vsel %vm191, %v198, %v200
    %v202 = vsel %vm190, %v180, %v183
    %v203 = vsel %vm193, %v189, 1326507024
    %v204 = vsel %vm192, %v186, %v203
    %v205 = vsel %vm191, %v202, %v204
    %v206 = vshll.u32 %v166, 8
    %v207 = vmul.u32.u64.compose %v206, %v205
    %v208 = vextract.low.u32 %v207
    %v209 = vextract.high.u32 %v207
    %v210 = vmul.u32.u64.compose %v206, %v201
    %v211 = vextract.low.u32 %v210
    %v212 = vextract.high.u32 %v210
    %v213 = vmul.u32 %v206, %v197
    %v214 = vadd.s32 %v209, %v211
    %vm215 = vc.u32 %v209, %v211
    %v216 = vadd.s32 %v212, 1
    %v217 = vsel %vm215, %v216, %v212
    %v218 = vadd.s32 %v213, %v217
    %v219 = vadd.s32 %v218, 536870912
    %v220 = vshrl.u32 %v219, 30
    %v221 = vshll.u32 %v220, 30
    %v222 = vsub.s32 %v218, %v221
    %vm223 = vcmp.lt.s32.totalorder %v222, 0
    %v224 = vsub.s32 0, %v222
    %v225 = vsel %vm223, %v224, %v222
    %v226 = vclz %v225
    %v227 = vsub.s32 %v226, 2
    %vm228 = vcmp.gt.s32.totalorder 0, %v227
    %v229 = vsel %vm228, 0, %v227
    %v230 = vsub.s32 32, %v229
    %v231 = vshll.u32 %v222, %v229
    %v232 = vshrl.u32 %v214, %v230
    %v233 = vor.u32 %v231, %v232
    %v234 = vsub.s32 4294967266, %v229
    %v235 = vadd.s32 %v234, 127
    %v236 = vshll.u32 %v235, 23
    %v237 = vor.u32 4788187, %v236
    %v238 = vand.u32 2147483647, %v237
    %v240 = vcvt.s32.f32 %v233
    %v241 = vmul.f32 %v240, %v238
    %v242 = vxor.u32 %v241, 2147483648
    %v243 = vsel %vm160, %v242, %v241
    %v244 = vsub.s32 4, %v220
    %v245 = vsel %vm160, %v244, %v220
    %v246 = vsel %vm159, %v53, %v243
    %v247 = vsel %vm159, 0, %v245
    %v248 = vcosq.f32.pop %v246
    %v249 = vsinq.f32.pop %v246
    %vm250 = vweird.f32 %v53
    %v251 = vadd.s32 %v247, 3
    %v252 = vand.u32 %v251, 3
    %vm253 = vcmp.lt.s32.totalorder %v252, 2
    %vm254 = vcmp.eq.s32.totalorder %v252, 0
    %v255 = vxor.u32 %v249, 2147483648
    %v256 = vsel %vm254, %v248, %v255
    %vm257 = vcmp.eq.s32.totalorder %v252, 2
    %v258 = vxor.u32 %v248, 2147483648
    %v259 = vsel %vm257, %v258, %v249
    %v260 = vsel %vm253, %v256, %v259
    %v261 = vsel %vm250, nan, %v260
    %v262 = vld [vmem:[#allocation2] sm:$0xff]
    %v263 = vld [vmem:[#allocation2 + $0x8] sm:$0xff]
    %v264 = vld [vmem:[#allocation2 + $0x10] sm:$0xff]
    %v265 = vld [vmem:[#allocation2 + $0x18] sm:$0xff]
    %v266 = vld [vmem:[#allocation2 + $0x20] sm:$0xff]
    %v267 = vld [vmem:[#allocation2 + $0x28] sm:$0xff]
    %v268 = vld [vmem:[#allocation2 + $0x30] sm:$0xff]
    %v269 = vld [vmem:[#allocation2 + $0x38] sm:$0xff]
    %271 = vset.pattern.permute.xlu0 64
    %272 = vperm.xlu0 %271, %v262
    %v273 = vpop.permute.xlu0 %272
    %276 = vset.pattern.permute.xlu0 64
    %277 = vperm.xlu0 %276, %v263
    %v278 = vpop.permute.xlu0 %277
    %281 = vset.pattern.permute.xlu0 64
    %282 = vperm.xlu0 %281, %v264
    %v283 = vpop.permute.xlu0 %282
    %286 = vset.pattern.permute.xlu0 64
    %287 = vperm.xlu0 %286, %v265
    %v288 = vpop.permute.xlu0 %287
    %291 = vset.pattern.permute.xlu0 64
    %292 = vperm.xlu0 %291, %v266
    %v293 = vpop.permute.xlu0 %292
    %296 = vset.pattern.permute.xlu0 64
    %297 = vperm.xlu0 %296, %v267
    %v298 = vpop.permute.xlu0 %297
    %301 = vset.pattern.permute.xlu0 64
    %302 = vperm.xlu0 %301, %v268
    %v303 = vpop.permute.xlu0 %302
    %306 = vset.pattern.permute.xlu0 64
    %307 = vperm.xlu0 %306, %v269
    %v308 = vpop.permute.xlu0 %307
    %vm310 = vcmask 171008
    %v311 = vsel %vm310, %v262, 0
    %v313 = vsel %vm310, %v263, 0
    %v315 = vsel %vm310, %v264, 0
    %v317 = vsel %vm310, %v265, 0
    %v319 = vsel %vm310, %v266, 0
    %v321 = vsel %vm310, %v267, 0
    %v323 = vsel %vm310, %v268, 0
    %v325 = vsel %vm310, %v269, 0
    %vm327 = vcmask 1044480
    %v329 = vsel %vm327, %v25, 0
    %331 = vmatprep.subr.mxu0 0.0
    %332 = vmatpush1.msra.mxu0 %v157
    %333 = vmatprep.subr.mxu0 0.0
    %334 = vmatpush1.msra.mxu0 %v261
    %335 = vmatprep.subr.mxu0 0.0
    %336 = vmatpush1.msra.mxu0 %v329
    %337 = vmatprep.subr.mxu0 0.0
    %338 = vmatpush1.msra.mxu0 0.0
    %339 = vmatprep.subr.mxu0 0.0
    %340 = vmatpush1.msra.mxu0 0.0
    %341 = vmatprep.subr.mxu0 0.0
    %342 = vmatpush1.msra.mxu0 0.0
    %343 = vmatprep.subr.mxu0 0.0
    %344 = vmatpush1.msra.mxu0 0.0
    %345 = vmatprep.subr.mxu0 0.0
    %346 = vmatpush1.msra.mxu0 0.0
    %347 = vmatprep.subr.mxu0 0.0
    %348 = vmatpush1.msra.mxu0 0.0
    %349 = vmatprep.subr.mxu0 0.0
    %350 = vmatpush1.msra.mxu0 0.0
    %351 = vmatprep.subr.mxu0 0.0
    %352 = vmatpush1.msra.mxu0 0.0
    %353 = vmatprep.subr.mxu0 0.0
    %354 = vmatpush1.msra.mxu0 0.0
    %355 = vmatprep.subr.mxu0 0.0
    %356 = vmatpush1.msra.mxu0 0.0
    %357 = vmatprep.subr.mxu0 0.0
    %358 = vmatpush1.msra.mxu0 0.0
    %359 = vmatprep.subr.mxu0 0.0
    %360 = vmatpush1.msra.mxu0 0.0
    %361 = vmatprep.subr.mxu0 0.0
    %362 = vmatpush1.msra.mxu0 0.0
    %363 = vmatprep.subr.mxu0 0.0
    %364 = vmatpush1.msra.mxu0 0.0
    %365 = vmatprep.subr.mxu0 0.0
    %366 = vmatpush1.msra.mxu0 0.0
    %367 = vmatprep.subr.mxu0 0.0
    %368 = vmatpush1.msra.mxu0 0.0
    %369 = vmatprep.subr.mxu0 0.0
    %370 = vmatpush1.msra.mxu0 0.0
    %371 = vmatprep.subr.mxu0 0.0
    %372 = vmatpush1.msra.mxu0 0.0
    %373 = vmatprep.subr.mxu0 0.0
    %374 = vmatpush1.msra.mxu0 0.0
    %375 = vmatprep.subr.mxu0 0.0
    %376 = vmatpush1.msra.mxu0 0.0
    %377 = vmatprep.subr.mxu0 0.0
    %378 = vmatpush1.msra.mxu0 0.0
    %379 = vmatprep.subr.mxu0 0.0
    %380 = vmatpush1.msra.mxu0 0.0
    %381 = vmatprep.subr.mxu0 0.0
    %382 = vmatpush1.msra.mxu0 0.0
    %383 = vmatprep.subr.mxu0 0.0
    %384 = vmatpush1.msra.mxu0 0.0
    %385 = vmatprep.subr.mxu0 0.0
    %386 = vmatpush1.msra.mxu0 0.0
    %387 = vmatprep.subr.mxu0 0.0
    %388 = vmatpush1.msra.mxu0 0.0
    %389 = vmatprep.subr.mxu0 0.0
    %390 = vmatpush1.msra.mxu0 0.0
    %391 = vmatprep.subr.mxu0 0.0
    %392 = vmatpush1.msra.mxu0 0.0
    %393 = vmatprep.subr.mxu0 0.0
    %394 = vmatpush1.msra.mxu0 0.0
    %395 = vmatprep.mubr.f32.mxu0 0.0
    %396 = vmatmul.mubr.f32.gmra.mrb[0].mxu0 %v311
    %v397 = vpop.f32.mrb[0].mxu0
    %v398 = vadd.f32 %v273, %v397
    %v399 = vpop.f32.mrb[0].mxu0
    %400 = vmatprep.mubr.f32.mxu0 0.0
    %401 = vmatmul.mubr.f32.gmra.mrb[0].mxu0 %v313
    %v402 = vpop.f32.mrb[0].mxu0
    %v403 = vadd.f32 %v278, %v402
    %v404 = vpop.f32.mrb[0].mxu0
    %405 = vmatprep.mubr.f32.mxu0 0.0
    %406 = vmatmul.mubr.f32.gmra.mrb[0].mxu0 %v315
    %v407 = vpop.f32.mrb[0].mxu0
    %v408 = vadd.f32 %v283, %v407
    %v409 = vpop.f32.mrb[0].mxu0
    %410 = vmatprep.mubr.f32.mxu0 0.0
    %411 = vmatmul.mubr.f32.gmra.mrb[0].mxu0 %v317
    %v412 = vpop.f32.mrb[0].mxu0
    %v413 = vadd.f32 %v288, %v412
    %v414 = vpop.f32.mrb[0].mxu0
    %415 = vmatprep.mubr.f32.mxu0 0.0
    %416 = vmatmul.mubr.f32.gmra.mrb[0].mxu0 %v319
    %v417 = vpop.f32.mrb[0].mxu0
    %v418 = vadd.f32 %v293, %v417
    %v419 = vpop.f32.mrb[0].mxu0
    %420 = vmatprep.mubr.f32.mxu0 0.0
    %421 = vmatmul.mubr.f32.gmra.mrb[0].mxu0 %v321
    %v422 = vpop.f32.mrb[0].mxu0
    %v423 = vadd.f32 %v298, %v422
    %v424 = vpop.f32.mrb[0].mxu0
    %425 = vmatprep.mubr.f32.mxu0 0.0
    %426 = vmatmul.mubr.f32.gmra.mrb[0].mxu0 %v323
    %v427 = vpop.f32.mrb[0].mxu0
    %v428 = vadd.f32 %v303, %v427
    %v429 = vpop.f32.mrb[0].mxu0
    %430 = vmatprep.mubr.f32.mxu0 0.0
    %431 = vmatmul.mubr.f32.gmra.mrb[0].mxu0 %v325
    %v432 = vpop.f32.mrb[0].mxu0
    %v433 = vadd.f32 %v308, %v432
    %v434 = vpop.f32.mrb[0].mxu0
    %435 = vdwg.mxu0
    %v436 = vxor.u32 %v398, 2147483648
    %v437 = vxor.u32 %v403, 2147483648
    %v438 = vxor.u32 %v408, 2147483648
    %v439 = vxor.u32 %v413, 2147483648
    %v440 = vxor.u32 %v418, 2147483648
    %v441 = vxor.u32 %v423, 2147483648
    %v442 = vxor.u32 %v428, 2147483648
    %v443 = vxor.u32 %v433, 2147483648
    %v444 = vmul.f32 %v436, 1.442695
    %v445 = vpow.pop %v444
    %v446 = vmul.f32 %v437, 1.442695
    %v447 = vpow.pop %v446
    %v448 = vmul.f32 %v438, 1.442695
    %v449 = vpow.pop %v448
    %v450 = vmul.f32 %v439, 1.442695
    %v451 = vpow.pop %v450
    %v452 = vmul.f32 %v440, 1.442695
    %v453 = vpow.pop %v452
    %v454 = vmul.f32 %v441, 1.442695
    %v455 = vpow.pop %v454
    %v456 = vmul.f32 %v442, 1.442695
    %v457 = vpow.pop %v456
    %v458 = vmul.f32 %v443, 1.442695
    %v459 = vpow.pop %v458
    %v460 = vadd.f32 %v445, 1.0
    %v461 = vadd.f32 %v447, 1.0
    %v462 = vadd.f32 %v449, 1.0
    %v463 = vadd.f32 %v451, 1.0
    %v464 = vadd.f32 %v453, 1.0
    %v465 = vadd.f32 %v455, 1.0
    %v466 = vadd.f32 %v457, 1.0
    %v467 = vadd.f32 %v459, 1.0
    %v468 = vrcp.pop %v460
    %v469 = vmul.f32 1.0, %v468
    %v470 = vrcp.pop %v461
    %v471 = vmul.f32 1.0, %v470
    %v472 = vrcp.pop %v462
    %v473 = vmul.f32 1.0, %v472
    %v474 = vrcp.pop %v463
    %v475 = vmul.f32 1.0, %v474
    %v476 = vrcp.pop %v464
    %v477 = vmul.f32 1.0, %v476
    %v478 = vrcp.pop %v465
    %v479 = vmul.f32 1.0, %v478
    %v480 = vrcp.pop %v466
    %v481 = vmul.f32 1.0, %v480
    %v482 = vrcp.pop %v467
    %v483 = vmul.f32 1.0, %v482
    %v484 = vmul.f32 %v398, %v469
    %v485 = vmul.f32 %v403, %v471
    %v486 = vmul.f32 %v408, %v473
    %v487 = vmul.f32 %v413, %v475
    %v488 = vmul.f32 %v418, %v477
    %v489 = vmul.f32 %v423, %v479
    %v490 = vmul.f32 %v428, %v481
    %v491 = vmul.f32 %v433, %v483
    %v492 = vld [vmem:[#allocation2 + $0x40] sm:$0xff]
    %v493 = vld [vmem:[#allocation2 + $0x48] sm:$0xff]
    %v494 = vld [vmem:[#allocation2 + $0x50] sm:$0xff]
    %v495 = vld [vmem:[#allocation2 + $0x58] sm:$0xff]
    %v496 = vld [vmem:[#allocation2] sm:$0xff]
    %v497 = vld [vmem:[#allocation2 + $0x8] sm:$0xff]
    %v498 = vld [vmem:[#allocation2 + $0x10] sm:$0xff]
    %v499 = vld [vmem:[#allocation2 + $0x18] sm:$0xff]
    %501 = vset.pattern.permute.xlu0 65
    %502 = vperm.xlu0 %501, %v496
    %v503 = vpop.permute.xlu0 %502
    %506 = vset.pattern.permute.xlu0 65
    %507 = vperm.xlu0 %506, %v497
    %v508 = vpop.permute.xlu0 %507
    %511 = vset.pattern.permute.xlu0 65
    %512 = vperm.xlu0 %511, %v498
    %v513 = vpop.permute.xlu0 %512
    %516 = vset.pattern.permute.xlu0 65
    %517 = vperm.xlu0 %516, %v499
    %v518 = vpop.permute.xlu0 %517
    %vm520 = vcmask 523264
    %v522 = vsel %vm520, %v492, 0
    %v525 = vsel %vm520, %v493, 0
    %v528 = vsel %vm520, %v494, 0
    %v531 = vsel %vm520, %v495, 0
    %533 = vmatprep.subr.mxu0 0.0
    %534 = vmatpush1.msra.mxu0 %v484
    %535 = vmatprep.subr.mxu0 0.0
    %536 = vmatpush1.msra.mxu0 %v485
    %537 = vmatprep.subr.mxu0 0.0
    %538 = vmatpush1.msra.mxu0 %v486
    %539 = vmatprep.subr.mxu0 0.0
    %540 = vmatpush1.msra.mxu0 %v487
    %541 = vmatprep.subr.mxu0 0.0
    %542 = vmatpush1.msra.mxu0 %v488
    %543 = vmatprep.subr.mxu0 0.0
    %544 = vmatpush1.msra.mxu0 %v489
    %545 = vmatprep.subr.mxu0 0.0
    %546 = vmatpush1.msra.mxu0 %v490
    %547 = vmatprep.subr.mxu0 0.0
    %548 = vmatpush1.msra.mxu0 %v491
    %549 = vmatprep.subr.mxu0 0.0
    %550 = vmatpush1.msra.mxu0 0.0
    %551 = vmatprep.subr.mxu0 0.0
    %552 = vmatpush1.msra.mxu0 0.0
    %553 = vmatprep.subr.mxu0 0.0
    %554 = vmatpush1.msra.mxu0 0.0
    %555 = vmatprep.subr.mxu0 0.0
    %556 = vmatpush1.msra.mxu0 0.0
    %557 = vmatprep.subr.mxu0 0.0
    %558 = vmatpush1.msra.mxu0 0.0
    %559 = vmatprep.subr.mxu0 0.0
    %560 = vmatpush1.msra.mxu0 0.0
    %561 = vmatprep.subr.mxu0 0.0
    %562 = vmatpush1.msra.mxu0 0.0
    %563 = vmatprep.subr.mxu0 0.0
    %564 = vmatpush1.msra.mxu0 0.0
    %565 = vmatprep.subr.mxu0 0.0
    %566 = vmatpush1.msra.mxu0 0.0
    %567 = vmatprep.subr.mxu0 0.0
    %568 = vmatpush1.msra.mxu0 0.0
    %569 = vmatprep.subr.mxu0 0.0
    %570 = vmatpush1.msra.mxu0 0.0
    %571 = vmatprep.subr.mxu0 0.0
    %572 = vmatpush1.msra.mxu0 0.0
    %573 = vmatprep.subr.mxu0 0.0
    %574 = vmatpush1.msra.mxu0 0.0
    %575 = vmatprep.subr.mxu0 0.0
    %576 = vmatpush1.msra.mxu0 0.0
    %577 = vmatprep.subr.mxu0 0.0
    %578 = vmatpush1.msra.mxu0 0.0
    %579 = vmatprep.subr.mxu0 0.0
    %580 = vmatpush1.msra.mxu0 0.0
    %581 = vmatprep.subr.mxu0 0.0
    %582 = vmatpush1.msra.mxu0 0.0
    %583 = vmatprep.subr.mxu0 0.0
    %584 = vmatpush1.msra.mxu0 0.0
    %585 = vmatprep.subr.mxu0 0.0
    %586 = vmatpush1.msra.mxu0 0.0
    %587 = vmatprep.subr.mxu0 0.0
    %588 = vmatpush1.msra.mxu0 0.0
    %589 = vmatprep.subr.mxu0 0.0
    %590 = vmatpush1.msra.mxu0 0.0
    %591 = vmatprep.subr.mxu0 0.0
    %592 = vmatpush1.msra.mxu0 0.0
    %593 = vmatprep.subr.mxu0 0.0
    %594 = vmatpush1.msra.mxu0 0.0
    %595 = vmatprep.subr.mxu0 0.0
    %596 = vmatpush1.msra.mxu0 0.0
    %597 = vmatprep.mubr.f32.mxu0 0.0
    %598 = vmatmul.mubr.f32.gmra.mrb[0].mxu0 %v522
    %v599 = vpop.f32.mrb[0].mxu0
    %v600 = vadd.f32 %v503, %v599
    %v601 = vpop.f32.mrb[0].mxu0
    %602 = vmatprep.mubr.f32.mxu0 0.0
    %603 = vmatmul.mubr.f32.gmra.mrb[0].mxu0 %v525
    %v604 = vpop.f32.mrb[0].mxu0
    %v605 = vadd.f32 %v508, %v604
    %v606 = vpop.f32.mrb[0].mxu0
    %607 = vmatprep.mubr.f32.mxu0 0.0
    %608 = vmatmul.mubr.f32.gmra.mrb[0].mxu0 %v528
    %v609 = vpop.f32.mrb[0].mxu0
    %v610 = vadd.f32 %v513, %v609
    %v611 = vpop.f32.mrb[0].mxu0
    %612 = vmatprep.mubr.f32.mxu0 0.0
    %613 = vmatmul.mubr.f32.gmra.mrb[0].mxu0 %v531
    %v614 = vpop.f32.mrb[0].mxu0
    %v615 = vadd.f32 %v518, %v614
    %v616 = vpop.f32.mrb[0].mxu0
    %617 = vdwg.mxu0
    %v618 = vxor.u32 %v600, 2147483648
    %v619 = vxor.u32 %v605, 2147483648
    %v620 = vxor.u32 %v610, 2147483648
    %v621 = vxor.u32 %v615, 2147483648
    %v622 = vmul.f32 %v618, 1.442695
    %v623 = vpow.pop %v622
    %v624 = vmul.f32 %v619, 1.442695
    %v625 = vpow.pop %v624
    %v626 = vmul.f32 %v620, 1.442695
    %v627 = vpow.pop %v626
    %v628 = vmul.f32 %v621, 1.442695
    %v629 = vpow.pop %v628
    %v630 = vadd.f32 %v623, 1.0
    %v631 = vadd.f32 %v625, 1.0
    %v632 = vadd.f32 %v627, 1.0
    %v633 = vadd.f32 %v629, 1.0
    %v634 = vrcp.pop %v630
    %v635 = vmul.f32 1.0, %v634
    %v636 = vrcp.pop %v631
    %v637 = vmul.f32 1.0, %v636
    %v638 = vrcp.pop %v632
    %v639 = vmul.f32 1.0, %v638
    %v640 = vrcp.pop %v633
    %v641 = vmul.f32 1.0, %v640
    %v642 = vmul.f32 %v600, %v635
    %v643 = vmul.f32 %v605, %v637
    %v644 = vmul.f32 %v610, %v639
    %v645 = vmul.f32 %v615, %v641
    %v646 = vld [vmem:[#allocation2 + $0x60] sm:$0xf]
    %v647 = vld [vmem:[#allocation2] sm:$0xf]
    %649 = vset.pattern.permute.xlu0 66
    %650 = vperm.xlu0 %649, %v647
    %v651 = vpop.permute.xlu0 %650
    %vm653 = vcmask 261120
    %v655 = vsel %vm653, %v646, 0
    %657 = vmatprep.subr.mxu0 0.0
    %658 = vmatpush1.msra.mxu0 %v642
    %659 = vmatprep.subr.mxu0 0.0
    %660 = vmatpush1.msra.mxu0 %v643
    %661 = vmatprep.subr.mxu0 0.0
    %662 = vmatpush1.msra.mxu0 %v644
    %663 = vmatprep.subr.mxu0 0.0
    %664 = vmatpush1.msra.mxu0 %v645
    %665 = vmatprep.subr.mxu0 0.0
    %666 = vmatpush1.msra.mxu0 0.0
    %667 = vmatprep.subr.mxu0 0.0
    %668 = vmatpush1.msra.mxu0 0.0
    %669 = vmatprep.subr.mxu0 0.0
    %670 = vmatpush1.msra.mxu0 0.0
    %671 = vmatprep.subr.mxu0 0.0
    %672 = vmatpush1.msra.mxu0 0.0
    %673 = vmatprep.subr.mxu0 0.0
    %674 = vmatpush1.msra.mxu0 0.0
    %675 = vmatprep.subr.mxu0 0.0
    %676 = vmatpush1.msra.mxu0 0.0
    %677 = vmatprep.subr.mxu0 0.0
    %678 = vmatpush1.msra.mxu0 0.0
    %679 = vmatprep.subr.mxu0 0.0
    %680 = vmatpush1.msra.mxu0 0.0
    %681 = vmatprep.subr.mxu0 0.0
    %682 = vmatpush1.msra.mxu0 0.0
    %683 = vmatprep.subr.mxu0 0.0
    %684 = vmatpush1.msra.mxu0 0.0
    %685 = vmatprep.subr.mxu0 0.0
    %686 = vmatpush1.msra.mxu0 0.0
    %687 = vmatprep.subr.mxu0 0.0
    %688 = vmatpush1.msra.mxu0 0.0
    %689 = vmatprep.subr.mxu0 0.0
    %690 = vmatpush1.msra.mxu0 0.0
    %691 = vmatprep.subr.mxu0 0.0
    %692 = vmatpush1.msra.mxu0 0.0
    %693 = vmatprep.subr.mxu0 0.0
    %694 = vmatpush1.msra.mxu0 0.0
    %695 = vmatprep.subr.mxu0 0.0
    %696 = vmatpush1.msra.mxu0 0.0
    %697 = vmatprep.subr.mxu0 0.0
    %698 = vmatpush1.msra.mxu0 0.0
    %699 = vmatprep.subr.mxu0 0.0
    %700 = vmatpush1.msra.mxu0 0.0
    %701 = vmatprep.subr.mxu0 0.0
    %702 = vmatpush1.msra.mxu0 0.0
    %703 = vmatprep.subr.mxu0 0.0
    %704 = vmatpush1.msra.mxu0 0.0
    %705 = vmatprep.subr.mxu0 0.0
    %706 = vmatpush1.msra.mxu0 0.0
    %707 = vmatprep.subr.mxu0 0.0
    %708 = vmatpush1.msra.mxu0 0.0
    %709 = vmatprep.subr.mxu0 0.0
    %710 = vmatpush1.msra.mxu0 0.0
    %711 = vmatprep.subr.mxu0 0.0
    %712 = vmatpush1.msra.mxu0 0.0
    %713 = vmatprep.subr.mxu0 0.0
    %714 = vmatpush1.msra.mxu0 0.0
    %715 = vmatprep.subr.mxu0 0.0
    %716 = vmatpush1.msra.mxu0 0.0
    %717 = vmatprep.subr.mxu0 0.0
    %718 = vmatpush1.msra.mxu0 0.0
    %719 = vmatprep.subr.mxu0 0.0
    %720 = vmatpush1.msra.mxu0 0.0
    %721 = vmatprep.mubr.f32.mxu0 0.0
    %722 = vmatmul.mubr.f32.gmra.mrb[0].mxu0 %v655
    %v723 = vpop.f32.mrb[0].mxu0
    %v724 = vadd.f32 %v651, %v723
    %v725 = vpop.f32.mrb[0].mxu0
    %726 = vdwg.mxu0
    %v727 = vmul.f32 %v25, 19.9
    %v728 = vadd.f32 %v727, 0.1
    %v729 = vrsqrt.pop %v728
    %v730 = vmul.f32 %v728, %v729
    %vm731 = vcmp.eq.f32.partialorder %v728, inf
    %v732 = vsel %vm731, %v728, %v730
    %vm733 = vcmp.eq.f32.partialorder %v728, 0.0
    %v734 = vand.u32 %v728, 2147483648
    %v735 = vsel %vm733, %v734, %v732
    %v736 = vlaneseq
    %v737 = vshrl.u32 %v736, 7
    %v738 = vsub.s32 0, %v737
    %v739 = vrot.slane %v735, %v738
    %v740 = vmul.f32 %v724, %v739
    %741 = vst [vmem:[%s2] sm:$0xf] %v740
    // Predicated region
    $region14: #{schrodinger_bridge_policy.1} parent=1 // pred_check
      _
    $region15: #{schrodinger_bridge_policy.1} parent=1 // pred_check_branch
      %743 = sbr.rel (0) target = $region17
    $region16: #{schrodinger_bridge_policy.1} parent=1 // pred_region
      _
    $region17: #{schrodinger_bridge_policy.1} parent=1 // pred_fallthru
      _
    // Predicated region
    $region18: #{schrodinger_bridge_policy.1} parent=1 // pred_check
      _
    $region19: #{schrodinger_bridge_policy.1} parent=1 // pred_check_branch
      %745 = sbr.rel (0) target = $region21
    $region20: #{schrodinger_bridge_policy.1} parent=1 // pred_region
      _
    $region21: #{schrodinger_bridge_policy.1} parent=1 // pred_fallthru
      _
    %746 = vsyncpa [#allocation3], 1

</llo_original>
